<compile_context>
chip_gen: v7x
topology: tpu7x:2x2x1
jax: 0.10.0
libtpu: 0.0.40
codegen_flags: <defaults>
</compile_context>

<pallas_src>
import functools

import jax
import jax.numpy as jnp
from jax.experimental import pallas as pl
from jax.experimental.pallas import tpu as pltpu


def _explain_kernel(x_ref, w_ref, b_ref, wcol_ref, out_ref, grad_ref, *, ci):
    """One batch tile of fused forward + analytic input-gradient.

    x_ref:    (TB, DP)  flattened (lane-padded) input tile
    w_ref:    (DP, KP)  lane-padded weights (VMEM-resident across grid steps)
    b_ref:    (1, KP)   lane-padded bias
    wcol_ref: (1, DP)   W[:, ci] laid out as a lane-dense row
    out_ref:  (TB, KP)  logits (padded columns stay zero)
    grad_ref: (TB, DP)  |dL/dX_flat| for L = sum(out[:, ci]^2)
    """
    x = x_ref[...]
    # forward: X @ W + b  (single MXU op; bias added so the explained logit is
    # the true post-bias value used by the loss)
    out = jnp.dot(x, w_ref[...], preferred_element_type=jnp.float32) + b_ref[...]
    out_ref[...] = out

    # rank-1 analytic backward: dL/dX[b, :] = 2 * out[b, ci] * W[:, ci]
    out_c = out[:, ci:ci + 1]                              # (TB, 1) static lane slice
    grad_ref[...] = jnp.abs(2.0 * out_c * wcol_ref[...])   # VPU broadcast-multiply


def explain_label_forward(X, W, b, explain_class_index=-1,
                          *, vmem_budget_bytes=20 * 1024 * 1024):
    """X: (B, C, H, W) f32; W: (D, K); b: (K,).
    Returns (output (B, K), grad (B, C, H, W)) matching
    ExplainLabel.forward(X) with explain_class_index < 0 and y=None."""
    # TODO(synk): the explain_class_index > -1 branch (fake_truth = zeros with an
    # optional normal_label_index entry set to 1) and the y-is-not-None training
    # branch (baseline model's (accuracies, loss) path) are not implemented.
    assert explain_class_index < 0, "only the clone-and-zero branch is implemented"

    Bsz, C, H, Wd = X.shape
    D = C * H * Wd
    K = W.shape[1]
    ci = explain_class_index % K            # -1 -> K-1 (index into the ORIGINAL K)

    def _round_up(a, m):
        return ((a + m - 1) // m) * m

    # --- lane-pad class axis (logit stores) and feature axis (grad stores / MXU)
    KP = _round_up(K, 128)
    DP = _round_up(D, 128)

    W_pad = jnp.zeros((DP, KP), jnp.float32).at[:D, :K].set(W.astype(jnp.float32))
    b_pad = jnp.zeros((1, KP), jnp.float32).at[0, :K].set(b.astype(jnp.float32))
    w_col = jnp.zeros((1, DP), jnp.float32).at[0, :D].set(W[:, ci].astype(jnp.float32))

    x_flat = X.reshape(Bsz, D).astype(jnp.float32)
    if DP != D:
        x_flat = jnp.zeros((Bsz, DP), jnp.float32).at[:, :D].set(x_flat)

    # --- batch tile: multiple of 8 sublanes, sized so double-buffered x/grad/out
    # tiles plus the resident weights fit a budget safe on every generation.
    resident = (DP * KP + KP + DP) * 4 * 2                 # W, b, w_col (2 buffers each)
    per_row = 2 * 2 * (2 * DP + KP) * 4                    # x + grad + out, double-buffered
    tb = max(8, min(512, (vmem_budget_bytes - resident) // per_row))
    tb = max(8, (tb // 8) * 8)
    tb = min(tb, _round_up(Bsz, 8))
    bp = _round_up(Bsz, tb)                                # padded batch, bp % tb == 0

    if bp != Bsz:
        x_flat = jnp.zeros((bp, DP), jnp.float32).at[:Bsz].set(x_flat)

    kernel = functools.partial(_explain_kernel, ci=ci)

    out_pad, grad_flat = pl.pallas_call(
        kernel,
        out_shape=(
            jax.ShapeDtypeStruct((bp, KP), jnp.float32),
            jax.ShapeDtypeStruct((bp, DP), jnp.float32),
        ),
        grid_spec=pltpu.PrefetchScalarGridSpec(
            num_scalar_prefetch=0,
            grid=(bp // tb,),
            in_specs=[
                pl.BlockSpec((tb, DP), lambda i: (i, 0)),   # x tile (streamed)
                pl.BlockSpec((DP, KP), lambda i: (0, 0)),   # W (resident)
                pl.BlockSpec((1, KP), lambda i: (0, 0)),    # b (resident)
                pl.BlockSpec((1, DP), lambda i: (0, 0)),    # W[:, ci] (resident)
            ],
            out_specs=(
                pl.BlockSpec((tb, KP), lambda i: (i, 0)),   # logits tile
                pl.BlockSpec((tb, DP), lambda i: (i, 0)),   # grad tile (streamed)
            ),
        ),
        compiler_params=pltpu.CompilerParams(
            dimension_semantics=("parallel",),
            vmem_limit_bytes=32 * 1024 * 1024,
        ),
    )(x_flat, W_pad, b_pad, w_col)

    out = out_pad[:Bsz, :K]
    grad = grad_flat[:Bsz, :D].reshape(Bsz, C, H, Wd)
    return out, grad


def _reference(X, W, b, explain_class_index=-1):
    """Pure-JAX reference replicating the PyTorch semantics via autodiff."""
    Bsz = X.shape[0]
    D = W.shape[0]

    def model(x):
        return x.reshape(Bsz, D) @ W + b[None, :]

    out = model(X)

    def loss_fn(x):
        o = model(x)
        fake = o.at[:, explain_class_index].set(0.0)
        return jnp.sum(jnp.square(fake - o))

    grad = jnp.abs(jax.grad(loss_fn)(X))
    return out, grad


if __name__ == "__main__":
    # small deterministic problem: batch=2, channels=4, spatial=16x16, classes=10
    B, C, H, Wd, K = 2, 4, 16, 16, 10
    D = C * H * Wd

    key = jax.random.PRNGKey(0)
    kx, kw, kb = jax.random.split(key, 3)
    X = jax.random.normal(kx, (B, C, H, Wd), dtype=jnp.float32)
    W = 0.02 * jax.random.normal(kw, (D, K), dtype=jnp.float32)
    b = 0.01 * jax.random.normal(kb, (K,), dtype=jnp.float32)

    out, grad = explain_label_forward(X, W, b)
    out = jax.block_until_ready(out)
    grad = jax.block_until_ready(grad)

    out_ref, grad_ref = _reference(X, W, b)
    assert jnp.allclose(out, out_ref, atol=1e-5, rtol=1e-5)
    assert jnp.allclose(grad, grad_ref, atol=1e-5, rtol=1e-5)

    print("KERNEL_OK")
</pallas_src>

<mosaic_0001>
module attributes {stable_mosaic.version = 11 : i64} {
  func.func @_explain_kernel(%arg0: i32, %arg1: memref<8x1024xf32, #tpu.memory_space<vmem>>, %arg2: memref<1024x128xf32, #tpu.memory_space<vmem>>, %arg3: memref<1x128xf32, #tpu.memory_space<vmem>>, %arg4: memref<1x1024xf32, #tpu.memory_space<vmem>>, %arg5: memref<8x128xf32, #tpu.memory_space<vmem>>, %arg6: memref<8x1024xf32, #tpu.memory_space<vmem>>) attributes {dimension_semantics = [#tpu.dimension_semantics<parallel>], iteration_bounds = array<i64: 1>, scalar_prefetch = 0 : i64, scratch_operands = 0 : i64, tpu.core_type = #tpu.core_type<tc>, window_params = [{transform_indices = @transform_0, window_bounds = array<i64: 8, 1024>}, {pipeline_mode = #tpu.pipeline_mode<synchronous>, transform_indices = @transform_1, window_bounds = array<i64: 1024, 128>}, {pipeline_mode = #tpu.pipeline_mode<synchronous>, transform_indices = @transform_2, window_bounds = array<i64: 1, 128>}, {pipeline_mode = #tpu.pipeline_mode<synchronous>, transform_indices = @transform_3, window_bounds = array<i64: 1, 1024>}, {transform_indices = @transform_4, window_bounds = array<i64: 8, 128>}, {transform_indices = @transform_5, window_bounds = array<i64: 8, 1024>}]} {
    %c0 = arith.constant 0 : index
    %c0_0 = arith.constant 0 : index
    %0 = vector.load %arg1[%c0, %c0_0] : memref<8x1024xf32, #tpu.memory_space<vmem>>, vector<8x1024xf32>
    %c0_1 = arith.constant 0 : index
    %c0_2 = arith.constant 0 : index
    %1 = vector.load %arg2[%c0_1, %c0_2] : memref<1024x128xf32, #tpu.memory_space<vmem>>, vector<1024x128xf32>
    %cst = arith.constant dense<0.000000e+00> : vector<8x128xf32>
    %2 = tpu.matmul %0, %1, %cst {dimension_numbers = #tpu.dot_dimension_numbers<[1], [0], [0], [1], [0, 0, 1, 1], [], []>} : vector<8x1024xf32>, vector<1024x128xf32>, vector<8x128xf32> -> vector<8x128xf32>
    %c0_3 = arith.constant 0 : index
    %c0_4 = arith.constant 0 : index
    %3 = vector.load %arg3[%c0_3, %c0_4] : memref<1x128xf32, #tpu.memory_space<vmem>>, vector<1x128xf32>
    %4 = vector.broadcast %3 : vector<1x128xf32> to vector<8x128xf32>
    %5 = arith.addf %2, %4 : vector<8x128xf32>
    %c0_5 = arith.constant 0 : index
    %c0_6 = arith.constant 0 : index
    %6 = vector.load %arg5[%c0_5, %c0_6] : memref<8x128xf32, #tpu.memory_space<vmem>>, vector<8x128xf32>
    tpu.vector_store %arg5[%c0_5, %c0_6], %5 {strides = array<i32>} : memref<8x128xf32, #tpu.memory_space<vmem>>, vector<8x128xf32>,
    %7 = vector.extract_strided_slice %5 {offsets = [0, 9], sizes = [8, 1], strides = [1, 1]} : vector<8x128xf32> to vector<8x1xf32>
    %cst_7 = arith.constant 2.000000e+00 : f32
    %8 = vector.broadcast %cst_7 : f32 to vector<8x1xf32>
    %9 = arith.mulf %8, %7 : vector<8x1xf32>
    %c0_8 = arith.constant 0 : index
    %c0_9 = arith.constant 0 : index
    %10 = vector.load %arg4[%c0_8, %c0_9] : memref<1x1024xf32, #tpu.memory_space<vmem>>, vector<1x1024xf32>
    %11 = vector.broadcast %9 : vector<8x1xf32> to vector<8x1024xf32>
    %12 = vector.broadcast %10 : vector<1x1024xf32> to vector<8x1024xf32>
    %13 = arith.mulf %11, %12 : vector<8x1024xf32>
    %14 = math.absf %13 : vector<8x1024xf32>
    %c0_10 = arith.constant 0 : index
    %c0_11 = arith.constant 0 : index
    %15 = vector.load %arg6[%c0_10, %c0_11] : memref<8x1024xf32, #tpu.memory_space<vmem>>, vector<8x1024xf32>
    tpu.vector_store %arg6[%c0_10, %c0_11], %14 {strides = array<i32>} : memref<8x1024xf32, #tpu.memory_space<vmem>>, vector<8x1024xf32>,
    return
  }
  func.func @transform_0(%arg0: i32) -> (i32, i32) {
    %c0_i32 = arith.constant 0 : i32
    %c0_i32_0 = arith.constant 0 : i32
    return %arg0, %c0_i32 : i32, i32
  }
  func.func @transform_1(%arg0: i32) -> (i32, i32) {
    %c0_i32 = arith.constant 0 : i32
    %c0_i32_0 = arith.constant 0 : i32
    %c0_i32_1 = arith.constant 0 : i32
    return %c0_i32, %c0_i32_0 : i32, i32
  }
  func.func @transform_2(%arg0: i32) -> (i32, i32) {
    %c0_i32 = arith.constant 0 : i32
    %c0_i32_0 = arith.constant 0 : i32
    %c0_i32_1 = arith.constant 0 : i32
    return %c0_i32, %c0_i32_0 : i32, i32
  }
  func.func @transform_3(%arg0: i32) -> (i32, i32) {
    %c0_i32 = arith.constant 0 : i32
    %c0_i32_0 = arith.constant 0 : i32
    %c0_i32_1 = arith.constant 0 : i32
    return %c0_i32, %c0_i32_0 : i32, i32
  }
  func.func @transform_4(%arg0: i32) -> (i32, i32) {
    %c0_i32 = arith.constant 0 : i32
    %c0_i32_0 = arith.constant 0 : i32
    return %arg0, %c0_i32 : i32, i32
  }
  func.func @transform_5(%arg0: i32) -> (i32, i32) {
    %c0_i32 = arith.constant 0 : i32
    %c0_i32_0 = arith.constant 0 : i32
    return %arg0, %c0_i32 : i32, i32
  }
}

</mosaic_0001>

<llo_original>
// kernel: tpu_custom_call.1
$region0: #{tpu_custom_call.1}
  #allocation0 [shape = 'u32[]', space=smem, size = 0x4, offset = 0x4, fixed_abs, tag = 'smem constant byte address 0x4 - core index']
  #allocation1 [shape = 'u32[144,128]{1,0:T(1,128)}', space=vmem, size = 0x12000, scoped, tag = 'internal scratch']
  %s0 = inlined_call_operand.hbm [shape: f32[8,1024], index: 0, kind: input, shape index: {}]
  %s1 = inlined_call_operand.hbm [shape: f32[1024,128], index: 1, kind: input, shape index: {}]
  %s2 = inlined_call_operand.vmem [shape: f32[1,128], index: 2, kind: input, shape index: {}]
  %s3 = inlined_call_operand.vmem [shape: f32[1,1024], index: 3, kind: input, shape index: {}]
  %s4 = inlined_call_operand.hbm [shape: f32[8,128], index: 4, kind: output, shape index: {0}]
  %s5 = inlined_call_operand.hbm [shape: f32[8,1024], index: 5, kind: output, shape index: {1}]
  %6 = xla_tuple %s4, %s5
  %s7 = sld [smem:[#allocation0]]
  $region42: #{tpu_custom_call.1} parent=0
    _
  %s9 = ssub.s32 1, %s7
  %s10 = scalar_select 0, %s9, %s7
  $region1: #{tpu_custom_call.1} parent=0
    #allocation2 [shape = 'u8[32768]{0}', space=vmem, size = 0x8000, scoped, tag = 'input window, operand 0, single buffered']
    #allocation3 [shape = 's32[1]{0}', space=sflag, size = 0x4, scoped, tag = 'scoped memory for tpu_custom_call.1']
    #allocation4 [shape = 's32[1]{0}', space=sflag, size = 0x4, scoped, tag = 'scoped memory for tpu_custom_call.1']
    #allocation5 [shape = 'u8[524288]{0}', space=vmem, size = 0x80000, scoped, tag = 'input window, operand 1, single buffered']
    #allocation6 [shape = 's32[1]{0}', space=sflag, size = 0x4, scoped, tag = 'scoped memory for tpu_custom_call.1']
    #allocation7 [shape = 'u8[4096]{0}', space=vmem, size = 0x1000, scoped, tag = 'output window, operand 0, single buffered']
    #allocation8 [shape = 'u8[32768]{0}', space=vmem, size = 0x8000, scoped, tag = 'output window, operand 1, single buffered']
    #allocation9 [shape = 's32[1]{0}', space=sflag, size = 0x4, scoped, tag = 'scoped memory for tpu_custom_call.1']
    %11 = vsyncpa [#allocation3], 0
    %12 = vsyncpa [#allocation6], 0
    %13 = vsyncpa [#allocation4], 0
    %14 = vsyncpa [#allocation9], 0
    // Predicated region
    $region2: #{tpu_custom_call.1} parent=1 // pred_check
      _
    $region3: #{tpu_custom_call.1} parent=1 // pred_check_branch
      %16 = sbr.rel (0) target = $region5
    $region4: #{tpu_custom_call.1} parent=1 // pred_region
      %s18 = ssub.s32 1024, 1024
      %19 = vsyncadd [#allocation3], %s18
      %s21 = sshll.u32 [#allocation2], 4
      %s22 = int_to_ptr.vmem [resolvable:$true] %s21
      %24 = dma.hbm_to_vmem [thread:$0]  %s0, 1024, %s22, [#allocation3]
    $region5: #{tpu_custom_call.1} parent=1 // pred_fallthru
      _
    // Predicated region
    $region6: #{tpu_custom_call.1} parent=1 // pred_check
      _
    $region7: #{tpu_custom_call.1} parent=1 // pred_check_branch
      %26 = sbr.rel (0) target = $region9
    $region8: #{tpu_custom_call.1} parent=1 // pred_region
      %s28 = ssub.s32 16384, 16384
      %29 = vsyncadd [#allocation6], %s28
      %s30 = sshll.u32 [#allocation5], 4
      %s31 = int_to_ptr.vmem [resolvable:$true] %s30
      %36 = dma.hbm_to_vmem [thread:$0]  %s1, 16384, %s31, [#allocation6], 128, 128, 8
    $region9: #{tpu_custom_call.1} parent=1 // pred_fallthru
      _
    // Predicated region
    $region10: #{tpu_custom_call.1} parent=1 // pred_check
      _
    $region11: #{tpu_custom_call.1} parent=1 // pred_check_branch
      %38 = sbr.rel (0) target = $region13
    $region12: #{tpu_custom_call.1} parent=1 // pred_region
      _
    $region13: #{tpu_custom_call.1} parent=1 // pred_fallthru
      _
    // Predicated region
    $region14: #{tpu_custom_call.1} parent=1 // pred_check
      _
    $region15: #{tpu_custom_call.1} parent=1 // pred_check_branch
      %40 = sbr.rel (0) target = $region17
    $region16: #{tpu_custom_call.1} parent=1 // pred_region
      _
    $region17: #{tpu_custom_call.1} parent=1 // pred_fallthru
      _
    // Predicated region
    $region18: #{tpu_custom_call.1} parent=1 // pred_check
      _
    $region19: #{tpu_custom_call.1} parent=1 // pred_check_branch
      %42 = sbr.rel (0) target = $region21
    $region20: #{tpu_custom_call.1} parent=1 // pred_region
      %43 = dma.done [#allocation3], 1024
    $region21: #{tpu_custom_call.1} parent=1 // pred_fallthru
      _
    // Predicated region
    $region22: #{tpu_custom_call.1} parent=1 // pred_check
      _
    $region23: #{tpu_custom_call.1} parent=1 // pred_check_branch
      %45 = sbr.rel (0) target = $region25
    $region24: #{tpu_custom_call.1} parent=1 // pred_region
      %46 = dma.done [#allocation6], 16384
    $region25: #{tpu_custom_call.1} parent=1 // pred_fallthru
      _
    %v47 = vld [vmem:[#allocation2] sm:$0xff]
    %v48 = vld [vmem:[#allocation2 + $0x8] sm:$0xff]
    %v49 = vld [vmem:[#allocation2 + $0x10] sm:$0xff]
    %v50 = vld [vmem:[#allocation2 + $0x18] sm:$0xff]
    %v51 = vld [vmem:[#allocation2 + $0x20] sm:$0xff]
    %v52 = vld [vmem:[#allocation2 + $0x28] sm:$0xff]
    %v53 = vld [vmem:[#allocation2 + $0x30] sm:$0xff]
    %v54 = vld [vmem:[#allocation2 + $0x38] sm:$0xff]
    %v55 = vld [vmem:[#allocation5] sm:$0xff]
    %v56 = vld [vmem:[#allocation5 + $0x8] sm:$0xff]
    %v57 = vld [vmem:[#allocation5 + $0x10] sm:$0xff]
    %v58 = vld [vmem:[#allocation5 + $0x18] sm:$0xff]
    %v59 = vld [vmem:[#allocation5 + $0x20] sm:$0xff]
    %v60 = vld [vmem:[#allocation5 + $0x28] sm:$0xff]
    %v61 = vld [vmem:[#allocation5 + $0x30] sm:$0xff]
    %v62 = vld [vmem:[#allocation5 + $0x38] sm:$0xff]
    %v63 = vld [vmem:[#allocation5 + $0x40] sm:$0xff]
    %v64 = vld [vmem:[#allocation5 + $0x48] sm:$0xff]
    %v65 = vld [vmem:[#allocation5 + $0x50] sm:$0xff]
    %v66 = vld [vmem:[#allocation5 + $0x58] sm:$0xff]
    %v67 = vld [vmem:[#allocation5 + $0x60] sm:$0xff]
    %v68 = vld [vmem:[#allocation5 + $0x68] sm:$0xff]
    %v69 = vld [vmem:[#allocation5 + $0x70] sm:$0xff]
    %v70 = vld [vmem:[#allocation5 + $0x78] sm:$0xff]
    %v71 = vld [vmem:[#allocation5 + $0x80] sm:$0xff]
    %v72 = vld [vmem:[#allocation5 + $0x88] sm:$0xff]
    %v73 = vld [vmem:[#allocation5 + $0x90] sm:$0xff]
    %v74 = vld [vmem:[#allocation5 + $0x98] sm:$0xff]
    %v75 = vld [vmem:[#allocation5 + $0xa0] sm:$0xff]
    %v76 = vld [vmem:[#allocation5 + $0xa8] sm:$0xff]
    %v77 = vld [vmem:[#allocation5 + $0xb0] sm:$0xff]
    %v78 = vld [vmem:[#allocation5 + $0xb8] sm:$0xff]
    %v79 = vld [vmem:[#allocation5 + $0xc0] sm:$0xff]
    %v80 = vld [vmem:[#allocation5 + $0xc8] sm:$0xff]
    %v81 = vld [vmem:[#allocation5 + $0xd0] sm:$0xff]
    %v82 = vld [vmem:[#allocation5 + $0xd8] sm:$0xff]
    %v83 = vld [vmem:[#allocation5 + $0xe0] sm:$0xff]
    %v84 = vld [vmem:[#allocation5 + $0xe8] sm:$0xff]
    %v85 = vld [vmem:[#allocation5 + $0xf0] sm:$0xff]
    %v86 = vld [vmem:[#allocation5 + $0xf8] sm:$0xff]
    %v87 = vld [vmem:[#allocation5 + $0x100] sm:$0xff]
    %v88 = vld [vmem:[#allocation5 + $0x108] sm:$0xff]
    %v89 = vld [vmem:[#allocation5 + $0x110] sm:$0xff]
    %v90 = vld [vmem:[#allocation5 + $0x118] sm:$0xff]
    %v91 = vld [vmem:[#allocation5 + $0x120] sm:$0xff]
    %v92 = vld [vmem:[#allocation5 + $0x128] sm:$0xff]
    %v93 = vld [vmem:[#allocation5 + $0x130] sm:$0xff]
    %v94 = vld [vmem:[#allocation5 + $0x138] sm:$0xff]
    %v95 = vld [vmem:[#allocation5 + $0x140] sm:$0xff]
    %v96 = vld [vmem:[#allocation5 + $0x148] sm:$0xff]
    %v97 = vld [vmem:[#allocation5 + $0x150] sm:$0xff]
    %v98 = vld [vmem:[#allocation5 + $0x158] sm:$0xff]
    %v99 = vld [vmem:[#allocation5 + $0x160] sm:$0xff]
    %v100 = vld [vmem:[#allocation5 + $0x168] sm:$0xff]
    %v101 = vld [vmem:[#allocation5 + $0x170] sm:$0xff]
    %v102 = vld [vmem:[#allocation5 + $0x178] sm:$0xff]
    %v103 = vld [vmem:[#allocation5 + $0x180] sm:$0xff]
    %v104 = vld [vmem:[#allocation5 + $0x188] sm:$0xff]
    %v105 = vld [vmem:[#allocation5 + $0x190] sm:$0xff]
    %v106 = vld [vmem:[#allocation5 + $0x198] sm:$0xff]
    %v107 = vld [vmem:[#allocation5 + $0x1a0] sm:$0xff]
    %v108 = vld [vmem:[#allocation5 + $0x1a8] sm:$0xff]
    %v109 = vld [vmem:[#allocation5 + $0x1b0] sm:$0xff]
    %v110 = vld [vmem:[#allocation5 + $0x1b8] sm:$0xff]
    %v111 = vld [vmem:[#allocation5 + $0x1c0] sm:$0xff]
    %v112 = vld [vmem:[#allocation5 + $0x1c8] sm:$0xff]
    %v113 = vld [vmem:[#allocation5 + $0x1d0] sm:$0xff]
    %v114 = vld [vmem:[#allocation5 + $0x1d8] sm:$0xff]
    %v115 = vld [vmem:[#allocation5 + $0x1e0] sm:$0xff]
    %v116 = vld [vmem:[#allocation5 + $0x1e8] sm:$0xff]
    %v117 = vld [vmem:[#allocation5 + $0x1f0] sm:$0xff]
    %v118 = vld [vmem:[#allocation5 + $0x1f8] sm:$0xff]
    %v119 = vld [vmem:[#allocation5 + $0x200] sm:$0xff]
    %v120 = vld [vmem:[#allocation5 + $0x208] sm:$0xff]
    %v121 = vld [vmem:[#allocation5 + $0x210] sm:$0xff]
    %v122 = vld [vmem:[#allocation5 + $0x218] sm:$0xff]
    %v123 = vld [vmem:[#allocation5 + $0x220] sm:$0xff]
    %v124 = vld [vmem:[#allocation5 + $0x228] sm:$0xff]
    %v125 = vld [vmem:[#allocation5 + $0x230] sm:$0xff]
    %v126 = vld [vmem:[#allocation5 + $0x238] sm:$0xff]
    %v127 = vld [vmem:[#allocation5 + $0x240] sm:$0xff]
    %v128 = vld [vmem:[#allocation5 + $0x248] sm:$0xff]
    %v129 = vld [vmem:[#allocation5 + $0x250] sm:$0xff]
    %v130 = vld [vmem:[#allocation5 + $0x258] sm:$0xff]
    %v131 = vld [vmem:[#allocation5 + $0x260] sm:$0xff]
    %v132 = vld [vmem:[#allocation5 + $0x268] sm:$0xff]
    %v133 = vld [vmem:[#allocation5 + $0x270] sm:$0xff]
    %v134 = vld [vmem:[#allocation5 + $0x278] sm:$0xff]
    %v135 = vld [vmem:[#allocation5 + $0x280] sm:$0xff]
    %v136 = vld [vmem:[#allocation5 + $0x288] sm:$0xff]
    %v137 = vld [vmem:[#allocation5 + $0x290] sm:$0xff]
    %v138 = vld [vmem:[#allocation5 + $0x298] sm:$0xff]
    %v139 = vld [vmem:[#allocation5 + $0x2a0] sm:$0xff]
    %v140 = vld [vmem:[#allocation5 + $0x2a8] sm:$0xff]
    %v141 = vld [vmem:[#allocation5 + $0x2b0] sm:$0xff]
    %v142 = vld [vmem:[#allocation5 + $0x2b8] sm:$0xff]
    %v143 = vld [vmem:[#allocation5 + $0x2c0] sm:$0xff]
    %v144 = vld [vmem:[#allocation5 + $0x2c8] sm:$0xff]
    %v145 = vld [vmem:[#allocation5 + $0x2d0] sm:$0xff]
    %v146 = vld [vmem:[#allocation5 + $0x2d8] sm:$0xff]
    %v147 = vld [vmem:[#allocation5 + $0x2e0] sm:$0xff]
    %v148 = vld [vmem:[#allocation5 + $0x2e8] sm:$0xff]
    %v149 = vld [vmem:[#allocation5 + $0x2f0] sm:$0xff]
    %v150 = vld [vmem:[#allocation5 + $0x2f8] sm:$0xff]
    %v151 = vld [vmem:[#allocation5 + $0x300] sm:$0xff]
    %v152 = vld [vmem:[#allocation5 + $0x308] sm:$0xff]
    %v153 = vld [vmem:[#allocation5 + $0x310] sm:$0xff]
    %v154 = vld [vmem:[#allocation5 + $0x318] sm:$0xff]
    %v155 = vld [vmem:[#allocation5 + $0x320] sm:$0xff]
    %v156 = vld [vmem:[#allocation5 + $0x328] sm:$0xff]
    %v157 = vld [vmem:[#allocation5 + $0x330] sm:$0xff]
    %v158 = vld [vmem:[#allocation5 + $0x338] sm:$0xff]
    %v159 = vld [vmem:[#allocation5 + $0x340] sm:$0xff]
    %v160 = vld [vmem:[#allocation5 + $0x348] sm:$0xff]
    %v161 = vld [vmem:[#allocation5 + $0x350] sm:$0xff]
    %v162 = vld [vmem:[#allocation5 + $0x358] sm:$0xff]
    %v163 = vld [vmem:[#allocation5 + $0x360] sm:$0xff]
    %v164 = vld [vmem:[#allocation5 + $0x368] sm:$0xff]
    %v165 = vld [vmem:[#allocation5 + $0x370] sm:$0xff]
    %v166 = vld [vmem:[#allocation5 + $0x378] sm:$0xff]
    %v167 = vld [vmem:[#allocation5 + $0x380] sm:$0xff]
    %v168 = vld [vmem:[#allocation5 + $0x388] sm:$0xff]
    %v169 = vld [vmem:[#allocation5 + $0x390] sm:$0xff]
    %v170 = vld [vmem:[#allocation5 + $0x398] sm:$0xff]
    %v171 = vld [vmem:[#allocation5 + $0x3a0] sm:$0xff]
    %v172 = vld [vmem:[#allocation5 + $0x3a8] sm:$0xff]
    %v173 = vld [vmem:[#allocation5 + $0x3b0] sm:$0xff]
    %v174 = vld [vmem:[#allocation5 + $0x3b8] sm:$0xff]
    %v175 = vld [vmem:[#allocation5 + $0x3c0] sm:$0xff]
    %v176 = vld [vmem:[#allocation5 + $0x3c8] sm:$0xff]
    %v177 = vld [vmem:[#allocation5 + $0x3d0] sm:$0xff]
    %v178 = vld [vmem:[#allocation5 + $0x3d8] sm:$0xff]
    %v179 = vld [vmem:[#allocation5 + $0x3e0] sm:$0xff]
    %v180 = vld [vmem:[#allocation5 + $0x3e8] sm:$0xff]
    %v181 = vld [vmem:[#allocation5 + $0x3f0] sm:$0xff]
    %v182 = vld [vmem:[#allocation5 + $0x3f8] sm:$0xff]
    %v183 = vld [vmem:[%s2] sm:$0x1]
    %v185 = vlaneseq
    %v186 = vshrl.u32 %v185, 7
    %v187 = vsub.s32 0, %v186
    %v188 = vrot.slane %v183, %v187
    %190 = vmatprep.subr.mxu0 0.0
    %191 = vmatpush1.msra.mxu0 %v55
    %192 = vmatprep.subr.mxu0 0.0
    %193 = vmatpush1.msra.mxu0 %v56
    %194 = vmatprep.subr.mxu0 0.0
    %195 = vmatpush1.msra.mxu0 %v57
    %196 = vmatprep.subr.mxu0 0.0
    %197 = vmatpush1.msra.mxu0 %v58
    %198 = vmatprep.subr.mxu0 0.0
    %199 = vmatpush1.msra.mxu0 %v59
    %200 = vmatprep.subr.mxu0 0.0
    %201 = vmatpush1.msra.mxu0 %v60
    %202 = vmatprep.subr.mxu0 0.0
    %203 = vmatpush1.msra.mxu0 %v61
    %204 = vmatprep.subr.mxu0 0.0
    %205 = vmatpush1.msra.mxu0 %v62
    %206 = vmatprep.subr.mxu0 0.0
    %207 = vmatpush1.msra.mxu0 %v63
    %208 = vmatprep.subr.mxu0 0.0
    %209 = vmatpush1.msra.mxu0 %v64
    %210 = vmatprep.subr.mxu0 0.0
    %211 = vmatpush1.msra.mxu0 %v65
    %212 = vmatprep.subr.mxu0 0.0
    %213 = vmatpush1.msra.mxu0 %v66
    %214 = vmatprep.subr.mxu0 0.0
    %215 = vmatpush1.msra.mxu0 %v67
    %216 = vmatprep.subr.mxu0 0.0
    %217 = vmatpush1.msra.mxu0 %v68
    %218 = vmatprep.subr.mxu0 0.0
    %219 = vmatpush1.msra.mxu0 %v69
    %220 = vmatprep.subr.mxu0 0.0
    %221 = vmatpush1.msra.mxu0 %v70
    %222 = vmatprep.subr.mxu0 0.0
    %223 = vmatpush1.msra.mxu0 %v71
    %224 = vmatprep.subr.mxu0 0.0
    %225 = vmatpush1.msra.mxu0 %v72
    %226 = vmatprep.subr.mxu0 0.0
    %227 = vmatpush1.msra.mxu0 %v73
    %228 = vmatprep.subr.mxu0 0.0
    %229 = vmatpush1.msra.mxu0 %v74
    %230 = vmatprep.subr.mxu0 0.0
    %231 = vmatpush1.msra.mxu0 %v75
    %232 = vmatprep.subr.mxu0 0.0
    %233 = vmatpush1.msra.mxu0 %v76
    %234 = vmatprep.subr.mxu0 0.0
    %235 = vmatpush1.msra.mxu0 %v77
    %236 = vmatprep.subr.mxu0 0.0
    %237 = vmatpush1.msra.mxu0 %v78
    %238 = vmatprep.subr.mxu0 0.0
    %239 = vmatpush1.msra.mxu0 %v79
    %240 = vmatprep.subr.mxu0 0.0
    %241 = vmatpush1.msra.mxu0 %v80
    %242 = vmatprep.subr.mxu0 0.0
    %243 = vmatpush1.msra.mxu0 %v81
    %244 = vmatprep.subr.mxu0 0.0
    %245 = vmatpush1.msra.mxu0 %v82
    %246 = vmatprep.subr.mxu0 0.0
    %247 = vmatpush1.msra.mxu0 %v83
    %248 = vmatprep.subr.mxu0 0.0
    %249 = vmatpush1.msra.mxu0 %v84
    %250 = vmatprep.subr.mxu0 0.0
    %251 = vmatpush1.msra.mxu0 %v85
    %252 = vmatprep.subr.mxu0 0.0
    %253 = vmatpush1.msra.mxu0 %v86
    %254 = vmatprep.mubr.f32.mxu0 %v48
    %255 = vmatmul.mubr.f32.gmra.mrb[0].mxu0 %v47
    %v256 = vpop.f32.mrb[0].mxu0
    %v257 = vadd.f32 %v188, %v256
    %v258 = vpop.f32.mrb[0].mxu0
    %259 = vdwg.mxu0
    %260 = vmatprep.subr.mxu0 0.0
    %261 = vmatpush1.msra.mxu0 %v87
    %262 = vmatprep.subr.mxu0 0.0
    %263 = vmatpush1.msra.mxu0 %v88
    %264 = vmatprep.subr.mxu0 0.0
    %265 = vmatpush1.msra.mxu0 %v89
    %266 = vmatprep.subr.mxu0 0.0
    %267 = vmatpush1.msra.mxu0 %v90
    %268 = vmatprep.subr.mxu0 0.0
    %269 = vmatpush1.msra.mxu0 %v91
    %270 = vmatprep.subr.mxu0 0.0
    %271 = vmatpush1.msra.mxu0 %v92
    %272 = vmatprep.subr.mxu0 0.0
    %273 = vmatpush1.msra.mxu0 %v93
    %274 = vmatprep.subr.mxu0 0.0
    %275 = vmatpush1.msra.mxu0 %v94
    %276 = vmatprep.subr.mxu0 0.0
    %277 = vmatpush1.msra.mxu0 %v95
    %278 = vmatprep.subr.mxu0 0.0
    %279 = vmatpush1.msra.mxu0 %v96
    %280 = vmatprep.subr.mxu0 0.0
    %281 = vmatpush1.msra.mxu0 %v97
    %282 = vmatprep.subr.mxu0 0.0
    %283 = vmatpush1.msra.mxu0 %v98
    %284 = vmatprep.subr.mxu0 0.0
    %285 = vmatpush1.msra.mxu0 %v99
    %286 = vmatprep.subr.mxu0 0.0
    %287 = vmatpush1.msra.mxu0 %v100
    %288 = vmatprep.subr.mxu0 0.0
    %289 = vmatpush1.msra.mxu0 %v101
    %290 = vmatprep.subr.mxu0 0.0
    %291 = vmatpush1.msra.mxu0 %v102
    %292 = vmatprep.subr.mxu0 0.0
    %293 = vmatpush1.msra.mxu0 %v103
    %294 = vmatprep.subr.mxu0 0.0
    %295 = vmatpush1.msra.mxu0 %v104
    %296 = vmatprep.subr.mxu0 0.0
    %297 = vmatpush1.msra.mxu0 %v105
    %298 = vmatprep.subr.mxu0 0.0
    %299 = vmatpush1.msra.mxu0 %v106
    %300 = vmatprep.subr.mxu0 0.0
    %301 = vmatpush1.msra.mxu0 %v107
    %302 = vmatprep.subr.mxu0 0.0
    %303 = vmatpush1.msra.mxu0 %v108
    %304 = vmatprep.subr.mxu0 0.0
    %305 = vmatpush1.msra.mxu0 %v109
    %306 = vmatprep.subr.mxu0 0.0
    %307 = vmatpush1.msra.mxu0 %v110
    %308 = vmatprep.subr.mxu0 0.0
    %309 = vmatpush1.msra.mxu0 %v111
    %310 = vmatprep.subr.mxu0 0.0
    %311 = vmatpush1.msra.mxu0 %v112
    %312 = vmatprep.subr.mxu0 0.0
    %313 = vmatpush1.msra.mxu0 %v113
    %314 = vmatprep.subr.mxu0 0.0
    %315 = vmatpush1.msra.mxu0 %v114
    %316 = vmatprep.subr.mxu0 0.0
    %317 = vmatpush1.msra.mxu0 %v115
    %318 = vmatprep.subr.mxu0 0.0
    %319 = vmatpush1.msra.mxu0 %v116
    %320 = vmatprep.subr.mxu0 0.0
    %321 = vmatpush1.msra.mxu0 %v117
    %322 = vmatprep.subr.mxu0 0.0
    %323 = vmatpush1.msra.mxu0 %v118
    %324 = vmatprep.mubr.f32.mxu0 %v50
    %325 = vmatmul.mubr.f32.gmra.mrb[0].mxu0 %v49
    %v326 = vpop.f32.mrb[0].mxu0
    %v327 = vadd.f32 %v257, %v326
    %v328 = vpop.f32.mrb[0].mxu0
    %329 = vdwg.mxu0
    %330 = vmatprep.subr.mxu0 0.0
    %331 = vmatpush1.msra.mxu0 %v119
    %332 = vmatprep.subr.mxu0 0.0
    %333 = vmatpush1.msra.mxu0 %v120
    %334 = vmatprep.subr.mxu0 0.0
    %335 = vmatpush1.msra.mxu0 %v121
    %336 = vmatprep.subr.mxu0 0.0
    %337 = vmatpush1.msra.mxu0 %v122
    %338 = vmatprep.subr.mxu0 0.0
    %339 = vmatpush1.msra.mxu0 %v123
    %340 = vmatprep.subr.mxu0 0.0
    %341 = vmatpush1.msra.mxu0 %v124
    %342 = vmatprep.subr.mxu0 0.0
    %343 = vmatpush1.msra.mxu0 %v125
    %344 = vmatprep.subr.mxu0 0.0
    %345 = vmatpush1.msra.mxu0 %v126
    %346 = vmatprep.subr.mxu0 0.0
    %347 = vmatpush1.msra.mxu0 %v127
    %348 = vmatprep.subr.mxu0 0.0
    %349 = vmatpush1.msra.mxu0 %v128
    %350 = vmatprep.subr.mxu0 0.0
    %351 = vmatpush1.msra.mxu0 %v129
    %352 = vmatprep.subr.mxu0 0.0
    %353 = vmatpush1.msra.mxu0 %v130
    %354 = vmatprep.subr.mxu0 0.0
    %355 = vmatpush1.msra.mxu0 %v131
    %356 = vmatprep.subr.mxu0 0.0
    %357 = vmatpush1.msra.mxu0 %v132
    %358 = vmatprep.subr.mxu0 0.0
    %359 = vmatpush1.msra.mxu0 %v133
    %360 = vmatprep.subr.mxu0 0.0
    %361 = vmatpush1.msra.mxu0 %v134
    %362 = vmatprep.subr.mxu0 0.0
    %363 = vmatpush1.msra.mxu0 %v135
    %364 = vmatprep.subr.mxu0 0.0
    %365 = vmatpush1.msra.mxu0 %v136
    %366 = vmatprep.subr.mxu0 0.0
    %367 = vmatpush1.msra.mxu0 %v137
    %368 = vmatprep.subr.mxu0 0.0
    %369 = vmatpush1.msra.mxu0 %v138
    %370 = vmatprep.subr.mxu0 0.0
    %371 = vmatpush1.msra.mxu0 %v139
    %372 = vmatprep.subr.mxu0 0.0
    %373 = vmatpush1.msra.mxu0 %v140
    %374 = vmatprep.subr.mxu0 0.0
    %375 = vmatpush1.msra.mxu0 %v141
    %376 = vmatprep.subr.mxu0 0.0
    %377 = vmatpush1.msra.mxu0 %v142
    %378 = vmatprep.subr.mxu0 0.0
    %379 = vmatpush1.msra.mxu0 %v143
    %380 = vmatprep.subr.mxu0 0.0
    %381 = vmatpush1.msra.mxu0 %v144
    %382 = vmatprep.subr.mxu0 0.0
    %383 = vmatpush1.msra.mxu0 %v145
    %384 = vmatprep.subr.mxu0 0.0
    %385 = vmatpush1.msra.mxu0 %v146
    %386 = vmatprep.subr.mxu0 0.0
    %387 = vmatpush1.msra.mxu0 %v147
    %388 = vmatprep.subr.mxu0 0.0
    %389 = vmatpush1.msra.mxu0 %v148
    %390 = vmatprep.subr.mxu0 0.0
    %391 = vmatpush1.msra.mxu0 %v149
    %392 = vmatprep.subr.mxu0 0.0
    %393 = vmatpush1.msra.mxu0 %v150
    %394 = vmatprep.mubr.f32.mxu0 %v52
    %395 = vmatmul.mubr.f32.gmra.mrb[0].mxu0 %v51
    %v396 = vpop.f32.mrb[0].mxu0
    %v397 = vadd.f32 %v327, %v396
    %v398 = vpop.f32.mrb[0].mxu0
    %399 = vdwg.mxu0
    %400 = vmatprep.subr.mxu0 0.0
    %401 = vmatpush1.msra.mxu0 %v151
    %402 = vmatprep.subr.mxu0 0.0
    %403 = vmatpush1.msra.mxu0 %v152
    %404 = vmatprep.subr.mxu0 0.0
    %405 = vmatpush1.msra.mxu0 %v153
    %406 = vmatprep.subr.mxu0 0.0
    %407 = vmatpush1.msra.mxu0 %v154
    %408 = vmatprep.subr.mxu0 0.0
    %409 = vmatpush1.msra.mxu0 %v155
    %410 = vmatprep.subr.mxu0 0.0
    %411 = vmatpush1.msra.mxu0 %v156
    %412 = vmatprep.subr.mxu0 0.0
    %413 = vmatpush1.msra.mxu0 %v157
    %414 = vmatprep.subr.mxu0 0.0
    %415 = vmatpush1.msra.mxu0 %v158
    %416 = vmatprep.subr.mxu0 0.0
    %417 = vmatpush1.msra.mxu0 %v159
    %418 = vmatprep.subr.mxu0 0.0
    %419 = vmatpush1.msra.mxu0 %v160
    %420 = vmatprep.subr.mxu0 0.0
    %421 = vmatpush1.msra.mxu0 %v161
    %422 = vmatprep.subr.mxu0 0.0
    %423 = vmatpush1.msra.mxu0 %v162
    %424 = vmatprep.subr.mxu0 0.0
    %425 = vmatpush1.msra.mxu0 %v163
    %426 = vmatprep.subr.mxu0 0.0
    %427 = vmatpush1.msra.mxu0 %v164
    %428 = vmatprep.subr.mxu0 0.0
    %429 = vmatpush1.msra.mxu0 %v165
    %430 = vmatprep.subr.mxu0 0.0
    %431 = vmatpush1.msra.mxu0 %v166
    %432 = vmatprep.subr.mxu0 0.0
    %433 = vmatpush1.msra.mxu0 %v167
    %434 = vmatprep.subr.mxu0 0.0
    %435 = vmatpush1.msra.mxu0 %v168
    %436 = vmatprep.subr.mxu0 0.0
    %437 = vmatpush1.msra.mxu0 %v169
    %438 = vmatprep.subr.mxu0 0.0
    %439 = vmatpush1.msra.mxu0 %v170
    %440 = vmatprep.subr.mxu0 0.0
    %441 = vmatpush1.msra.mxu0 %v171
    %442 = vmatprep.subr.mxu0 0.0
    %443 = vmatpush1.msra.mxu0 %v172
    %444 = vmatprep.subr.mxu0 0.0
    %445 = vmatpush1.msra.mxu0 %v173
    %446 = vmatprep.subr.mxu0 0.0
    %447 = vmatpush1.msra.mxu0 %v174
    %448 = vmatprep.subr.mxu0 0.0
    %449 = vmatpush1.msra.mxu0 %v175
    %450 = vmatprep.subr.mxu0 0.0
    %451 = vmatpush1.msra.mxu0 %v176
    %452 = vmatprep.subr.mxu0 0.0
    %453 = vmatpush1.msra.mxu0 %v177
    %454 = vmatprep.subr.mxu0 0.0
    %455 = vmatpush1.msra.mxu0 %v178
    %456 = vmatprep.subr.mxu0 0.0
    %457 = vmatpush1.msra.mxu0 %v179
    %458 = vmatprep.subr.mxu0 0.0
    %459 = vmatpush1.msra.mxu0 %v180
    %460 = vmatprep.subr.mxu0 0.0
    %461 = vmatpush1.msra.mxu0 %v181
    %462 = vmatprep.subr.mxu0 0.0
    %463 = vmatpush1.msra.mxu0 %v182
    %464 = vmatprep.mubr.f32.mxu0 %v54
    %465 = vmatmul.mubr.f32.gmra.mrb[0].mxu0 %v53
    %v466 = vpop.f32.mrb[0].mxu0
    %v467 = vadd.f32 %v397, %v466
    %v468 = vpop.f32.mrb[0].mxu0
    %469 = vdwg.mxu0
    %470 = vst [vmem:[#allocation7] sm:$0xff] %v467
    %v471 = vmul.f32 %v467, 2.0
    %v472 = vld [vmem:[%s3] sm:$0xff]
    %474 = vset.pattern.permute.xlu0 9
    %475 = vperm.xlu0 %474, %v471
    %v476 = vpop.permute.xlu0 %475
    %v479 = vlaneseq
    %v480 = vshrl.u32 %v479, 7
    %v481 = vsub.s32 0, %v480
    %v482 = vrot.slane %v472, %v481
    %v483 = vlaneseq
    %v484 = vshrl.u32 %v483, 7
    %v485 = vsub.s32 1, %v484
    %v486 = vrot.slane %v472, %v485
    %v487 = vlaneseq
    %v488 = vshrl.u32 %v487, 7
    %v489 = vsub.s32 2, %v488
    %v490 = vrot.slane %v472, %v489
    %v491 = vlaneseq
    %v492 = vshrl.u32 %v491, 7
    %v493 = vsub.s32 3, %v492
    %v494 = vrot.slane %v472, %v493
    %v495 = vlaneseq
    %v496 = vshrl.u32 %v495, 7
    %v497 = vsub.s32 4, %v496
    %v498 = vrot.slane %v472, %v497
    %v499 = vlaneseq
    %v500 = vshrl.u32 %v499, 7
    %v501 = vsub.s32 5, %v500
    %v502 = vrot.slane %v472, %v501
    %v503 = vlaneseq
    %v504 = vshrl.u32 %v503, 7
    %v505 = vsub.s32 6, %v504
    %v506 = vrot.slane %v472, %v505
    %v507 = vlaneseq
    %v508 = vshrl.u32 %v507, 7
    %v509 = vsub.s32 7, %v508
    %v510 = vrot.slane %v472, %v509
    %v519 = vmul.f32 %v476, %v482
    %v520 = vmul.f32 %v476, %v486
    %v521 = vmul.f32 %v476, %v490
    %v522 = vmul.f32 %v476, %v494
    %v523 = vmul.f32 %v476, %v498
    %v524 = vmul.f32 %v476, %v502
    %v525 = vmul.f32 %v476, %v506
    %v526 = vmul.f32 %v476, %v510
    %v527 = vand.u32 2147483647, %v519
    %v528 = vand.u32 2147483647, %v520
    %v529 = vand.u32 2147483647, %v521
    %v530 = vand.u32 2147483647, %v522
    %v531 = vand.u32 2147483647, %v523
    %v532 = vand.u32 2147483647, %v524
    %v533 = vand.u32 2147483647, %v525
    %v534 = vand.u32 2147483647, %v526
    %535 = vst [vmem:[#allocation8] sm:$0xff] %v527
    %536 = vst [vmem:[#allocation8 + $0x8] sm:$0xff] %v528
    %537 = vst [vmem:[#allocation8 + $0x10] sm:$0xff] %v529
    %538 = vst [vmem:[#allocation8 + $0x18] sm:$0xff] %v530
    %539 = vst [vmem:[#allocation8 + $0x20] sm:$0xff] %v531
    %540 = vst [vmem:[#allocation8 + $0x28] sm:$0xff] %v532
    %541 = vst [vmem:[#allocation8 + $0x30] sm:$0xff] %v533
    %542 = vst [vmem:[#allocation8 + $0x38] sm:$0xff] %v534
    // Predicated region
    $region26: #{tpu_custom_call.1} parent=1 // pred_check
      _
    $region27: #{tpu_custom_call.1} parent=1 // pred_check_branch
      %544 = sbr.rel (0) target = $region29
    $region28: #{tpu_custom_call.1} parent=1 // pred_region
      %s546 = ssub.s32 128, 128
      %547 = vsyncadd [#allocation4], %s546
      %s549 = sshll.u32 [#allocation7], 4
      %s550 = int_to_ptr.vmem [resolvable:$true] %s549
      %552 = dma.vmem_to_hbm [thread:$0]  %s550, 128, %s4, [#allocation4]
    $region29: #{tpu_custom_call.1} parent=1 // pred_fallthru
      _
    // Predicated region
    $region30: #{tpu_custom_call.1} parent=1 // pred_check
      _
    $region31: #{tpu_custom_call.1} parent=1 // pred_check_branch
      %554 = sbr.rel (0) target = $region33
    $region32: #{tpu_custom_call.1} parent=1 // pred_region
      %s556 = ssub.s32 1024, 1024
      %557 = vsyncadd [#allocation9], %s556
      %s559 = sshll.u32 [#allocation8], 4
      %s560 = int_to_ptr.vmem [resolvable:$true] %s559
      %562 = dma.vmem_to_hbm [thread:$0]  %s560, 1024, %s5, [#allocation9]
    $region33: #{tpu_custom_call.1} parent=1 // pred_fallthru
      _
    // Predicated region
    $region34: #{tpu_custom_call.1} parent=1 // pred_check
      _
    $region35: #{tpu_custom_call.1} parent=1 // pred_check_branch
      %564 = sbr.rel (0) target = $region37
    $region36: #{tpu_custom_call.1} parent=1 // pred_region
      %565 = dma.done [#allocation4], 128
    $region37: #{tpu_custom_call.1} parent=1 // pred_fallthru
      _
    // Predicated region
    $region38: #{tpu_custom_call.1} parent=1 // pred_check
      _
    $region39: #{tpu_custom_call.1} parent=1 // pred_check_branch
      %567 = sbr.rel (0) target = $region41
    $region40: #{tpu_custom_call.1} parent=1 // pred_region
      %568 = dma.done [#allocation9], 1024
    $region41: #{tpu_custom_call.1} parent=1 // pred_fallthru
      _
    %569 = vsyncpa [#allocation3], 1
    %570 = vsyncpa [#allocation6], 1
    %571 = vsyncpa [#allocation4], 1
    %572 = vsyncpa [#allocation9], 1

</llo_original>
